<compile_context>
chip_gen: v6e
topology: v6e:2x2x1
jax: 0.10.0
libtpu: 0.0.40
codegen_flags: <defaults>
</compile_context>

<pallas_src>
import functools

import numpy as np
import jax
import jax.numpy as jnp
from jax.experimental import pallas as pl
from jax.experimental.pallas import tpu as pltpu


_LANE = 128                               # lane-density target for channel dims


def _rup(c, m=_LANE):
    return ((c + m - 1) // m) * m


def _detect_vmem_limit():
    """Per-generation scoped-VMEM budget: ~3/4 of physical (96 MiB on
    v5e/v6e's 128 MiB, 48 MiB on v7x's 64 MiB)."""
    cap = 64 * 1024 * 1024
    try:
        info = pltpu.get_tpu_info()
        cap = int(getattr(info, "vmem_capacity_bytes", cap) or cap)
    except Exception:
        pass
    return max(32 << 20, min((cap * 3) // 4, 112 << 20))


_VMEM_LIMIT = _detect_vmem_limit()


# ----------------------------- Pallas kernels ------------------------------

def _gemm_kernel(*refs, relu, has_res):
    """(TILE_M,K)@(K,N) on the MXU; fused bias (+residual) (+ReLU) epilogue."""
    if has_res:
        x_ref, w_ref, b_ref, r_ref, o_ref = refs
    else:
        x_ref, w_ref, b_ref, o_ref = refs
        r_ref = None
    acc = jnp.dot(x_ref[...], w_ref[...], preferred_element_type=jnp.float32)
    acc = acc + b_ref[...]                       # (1, N) broadcast; scale pre-folded
    if r_ref is not None:
        acc = acc + r_ref[...].astype(jnp.float32)   # fused residual add
    if relu:
        acc = jnp.maximum(acc, 0.0)
    o_ref[...] = acc.astype(o_ref.dtype)


@functools.partial(jax.jit, static_argnames=("relu",))
def gemm_bias_act(x, w, b, residual=None, *, relu):
    """relu?(x @ w + b [+ residual]); bf16 MXU inputs, f32 accumulation.

    Gridded over M with VMEM-resident weights/bias; the M axis is "parallel".
    At least 2 M-tiles whenever M >= 64 so v7x's 2nd TensorCore gets work.
    """
    m, k = x.shape
    n = w.shape[1]
    # Resident (double-buffered) weight + bias bytes eat into the VMEM budget.
    resident = 2 * (2 * k * n) + 2 * 4 * n
    budget = max(_VMEM_LIMIT // 2 - resident, 2 << 20)
    per_row = 2 * (2 * k + 2 * n) + (4 * n if residual is not None else 0)
    tile_m = max(8, min(1024, (budget // max(per_row, 1)) // 8 * 8))
    if m >= 64:
        # Keep >= 2 M-tiles so the grid can be megacore-sharded (v7x, 2 TCs).
        tile_m = min(tile_m, max(8, ((-(-m // 2)) + 7) // 8 * 8))
    if tile_m >= m:
        tile_m, m_pad = m, m
    else:
        m_pad = -(-m // tile_m) * tile_m
    if m_pad != m:
        x = jnp.pad(x, ((0, m_pad - m), (0, 0)))
        if residual is not None:
            residual = jnp.pad(residual, ((0, m_pad - m), (0, 0)))

    in_specs = [pl.BlockSpec((tile_m, k), lambda i: (i, 0)),
                pl.BlockSpec((k, n), lambda i: (0, 0)),      # resident weights
                pl.BlockSpec((1, n), lambda i: (0, 0))]      # resident bias
    args = [x, w, b]
    if residual is not None:
        in_specs.append(pl.BlockSpec((tile_m, n), lambda i: (i, 0)))
        args.append(residual)

    bytes_accessed = 2 * (m_pad * k + k * n + m_pad * n) + 4 * n
    if residual is not None:
        bytes_accessed += 2 * m_pad * n

    out = pl.pallas_call(
        functools.partial(_gemm_kernel, relu=relu, has_res=residual is not None),
        out_shape=jax.ShapeDtypeStruct((m_pad, n), jnp.bfloat16),
        grid=(m_pad // tile_m,),
        in_specs=in_specs,
        out_specs=pl.BlockSpec((tile_m, n), lambda i: (i, 0)),
        compiler_params=pltpu.CompilerParams(
            dimension_semantics=("parallel",),
            vmem_limit_bytes=_VMEM_LIMIT),
        cost_estimate=pl.CostEstimate(flops=2 * m_pad * k * n,
                                      transcendentals=0,
                                      bytes_accessed=bytes_accessed),
    )(*args)
    return out[:m] if m_pad != m else out


def _conv3x3_s1_kernel(x_ref, w_ref, b_ref, o_ref, *, cin, tile_h, w, relu):
    """3x3/stride-1 conv, tile_h output rows per step, single K=9*cin matmul.

    x_ref holds the padded image flattened to ((h+2)*(w+2), cin); each tap is
    a contiguous (L, cin) slice where L covers tile_h output rows plus the
    2*(tile_h-1) wrap-around positions between rows, whose results are simply
    never stored.  No in-kernel reshapes needed.
    """
    i = pl.program_id(1)
    wp = w + 2
    r0 = i * tile_h                                  # first output row of tile
    L = (tile_h - 1) * wp + w
    taps = []
    for di in range(3):
        for dj in range(3):
            start = (r0 + di) * wp + dj
            taps.append(x_ref[0, pl.ds(start, L), :])            # (L, cin)
    patch = jnp.concatenate(taps, axis=-1)                        # (L, 9*cin)
    acc = jnp.dot(patch, w_ref[...], preferred_element_type=jnp.float32)
    acc = acc + b_ref[...]
    if relu:
        acc = jnp.maximum(acc, 0.0)
    out = acc.astype(o_ref.dtype)
    for q in range(tile_h):                          # drop inter-row garbage
        o_ref[0, q] = out[q * wp:q * wp + w, :]


@functools.partial(jax.jit, static_argnames=("relu",))
def conv3x3_s1(x, wmat, b, *, relu):
    """NHWC 3x3 conv, stride 1, pad 1; padded image kept VMEM-resident per n."""
    n, h, w, cin = x.shape
    cout = wmat.shape[1]
    # Largest divisor of h whose M (= tile_h*(w+2)) stays in the 128-512 band.
    tile_h = 1
    for t in range(min(h, 32), 0, -1):
        if h % t == 0 and t * (w + 2) <= 512:
            tile_h = t
            break
    hw2 = (h + 2) * (w + 2)
    xp = jnp.pad(x, ((0, 0), (1, 1), (1, 1), (0, 0))).reshape(n, hw2, cin)
    return pl.pallas_call(
        functools.partial(_conv3x3_s1_kernel, cin=cin, tile_h=tile_h, w=w,
                          relu=relu),
        out_shape=jax.ShapeDtypeStruct((n, h, w, cout), x.dtype),
        grid=(n, h // tile_h),
        in_specs=[pl.BlockSpec((1, hw2, cin), lambda b_, i: (b_, 0, 0)),
                  pl.BlockSpec((9 * cin, cout), lambda b_, i: (0, 0)),
                  pl.BlockSpec((1, cout), lambda b_, i: (0, 0))],
        out_specs=pl.BlockSpec((1, tile_h, w, cout), lambda b_, i: (b_, i, 0, 0)),
        compiler_params=pltpu.CompilerParams(
            dimension_semantics=("parallel", "parallel"),
            vmem_limit_bytes=_VMEM_LIMIT),
        cost_estimate=pl.CostEstimate(
            flops=2 * n * h * w * 9 * cin * cout,
            transcendentals=0,
            bytes_accessed=2 * (n * hw2 * cin + 9 * cin * cout
                                + n * h * w * cout)),
    )(xp, wmat, b)


def _maxpool_kernel(xe_ref, xo_ref, o_ref, *, tile_ho):
    """3x3/stride-2 max pool: tile_ho output rows per step, subsampled output
    written directly (input pre-split into even/odd padded columns)."""
    i = pl.program_id(1)
    wo = o_ref.shape[2]
    for q in range(tile_ho):
        r = (i * tile_ho + q) * 2
        re = jnp.maximum(jnp.maximum(xe_ref[0, r, :, :], xe_ref[0, r + 1, :, :]),
                         xe_ref[0, r + 2, :, :])                 # (we, c)
        ro = jnp.maximum(jnp.maximum(xo_ref[0, r, :, :], xo_ref[0, r + 1, :, :]),
                         xo_ref[0, r + 2, :, :])                 # (wodd, c)
        mx = jnp.maximum(jnp.maximum(re[0:wo, :], ro[0:wo, :]), re[1:wo + 1, :])
        o_ref[0, q] = mx.astype(o_ref.dtype)


@jax.jit
def max_pool_3x3_s2(x):
    """torch.nn.MaxPool2d(3, stride=2, padding=1) on NHWC input."""
    n, h, w, c = x.shape
    ho = (h - 1) // 2 + 1
    wo = (w - 1) // 2 + 1
    pad_val = float(jnp.finfo(x.dtype).min)
    xp = jnp.pad(x, ((0, 0), (1, 1), (1, 1), (0, 0)), constant_values=pad_val)
    xe = xp[:, :, 0::2, :]          # even padded columns  (we = wo + 1)
    xo = xp[:, :, 1::2, :]          # odd padded columns   (>= wo)
    we, wod = xe.shape[2], xo.shape[2]
    tile_ho = 1
    for t in range(min(ho, 8), 0, -1):
        if ho % t == 0:
            tile_ho = t
            break
    return pl.pallas_call(
        functools.partial(_maxpool_kernel, tile_ho=tile_ho),
        out_shape=jax.ShapeDtypeStruct((n, ho, wo, c), x.dtype),
        grid=(n, ho // tile_ho),
        in_specs=[pl.BlockSpec((1, h + 2, we, c), lambda b_, i: (b_, 0, 0, 0)),
                  pl.BlockSpec((1, h + 2, wod, c), lambda b_, i: (b_, 0, 0, 0))],
        out_specs=pl.BlockSpec((1, tile_ho, wo, c), lambda b_, i: (b_, i, 0, 0)),
        compiler_params=pltpu.CompilerParams(
            dimension_semantics=("parallel", "parallel"),
            vmem_limit_bytes=_VMEM_LIMIT),
    )(xe, xo)


def _mean_kernel(x_ref, o_ref, *, inv_hw):
    @pl.when(pl.program_id(0) == 0)
    def _():
        o_ref[...] = jnp.zeros_like(o_ref)
    o_ref[...] += jnp.sum(x_ref[...].astype(jnp.float32), axis=1) * inv_hw


@jax.jit
def spatial_mean(x):
    """x: (N, H*W, C) bf16 -> (N, C) f32  == x.mean(3).mean(2)."""
    n, hw, c = x.shape
    tile = hw if hw <= 1024 else 512
    hw_pad = -(-hw // tile) * tile
    if hw_pad != hw:                 # zero padding does not change the sum
        x = jnp.pad(x, ((0, 0), (0, hw_pad - hw), (0, 0)))
    return pl.pallas_call(
        functools.partial(_mean_kernel, inv_hw=1.0 / hw),
        out_shape=jax.ShapeDtypeStruct((n, c), jnp.float32),
        grid=(hw_pad // tile,),
        in_specs=[pl.BlockSpec((n, tile, c), lambda k_: (0, k_, 0))],
        out_specs=pl.BlockSpec((n, c), lambda k_: (0, 0)),
        compiler_params=pltpu.CompilerParams(
            dimension_semantics=("arbitrary",),
            vmem_limit_bytes=_VMEM_LIMIT),
    )(x)


# ------------------------------- conv glue ----------------------------------

def _im2col(x, kh, kw, stride, pad):
    """NHWC -> (N, Ho, Wo, kh*kw*C) patches.  Only for the 7x7 stem and the
    three stride-2 3x3 convs; all stride-1 3x3 convs use conv3x3_s1."""
    n, h, w, c = x.shape
    xp = jnp.pad(x, ((0, 0), (pad, pad), (pad, pad), (0, 0)))
    ho = (h + 2 * pad - kh) // stride + 1
    wo = (w + 2 * pad - kw) // stride + 1
    cols = []
    for i in range(kh):
        for j in range(kw):
            cols.append(xp[:, i:i + (ho - 1) * stride + 1:stride,
                             j:j + (wo - 1) * stride + 1:stride, :])
    return jnp.concatenate(cols, axis=-1), ho, wo


def conv_im2col(x, p, *, stride, relu):
    patches, ho, wo = _im2col(x, p["kh"], p["kw"], stride, p["pad"])
    n = x.shape[0]
    k = patches.shape[-1]
    k_w = p["w"].shape[0]
    if k_w != k:
        # Stem: zero-pad K (=49*3=147) up to the lane-aligned weight rows (256)
        # so the largest-M GEMM of the network has a dense contraction.
        patches = jnp.pad(patches, ((0, 0), (0, 0), (0, 0), (0, k_w - k)))
    out = gemm_bias_act(patches.reshape(n * ho * wo, k_w), p["w"], p["bias"],
                        relu=relu)
    return out.reshape(n, ho, wo, p["w"].shape[1])


def conv1x1(x, p, *, stride, relu, residual=None):
    if stride != 1:
        # TODO(synk): the 2x2 spatial subsample of the 4 downsample convs still
        # goes through an XLA strided slice; folding it into the GEMM input is
        # a minor remaining HBM-traffic saving.
        x = x[:, ::stride, ::stride, :]
    n, h, w, c = x.shape
    res2d = None if residual is None else residual.reshape(n * h * w, -1)
    out = gemm_bias_act(x.reshape(n * h * w, c), p["w"], p["bias"],
                        residual=res2d, relu=relu)
    return out.reshape(n, h, w, p["w"].shape[1])


def conv3x3(x, p, *, stride, relu):
    if stride == 1:
        return conv3x3_s1(x, p["w"], p["bias"], relu=relu)
    # TODO(synk): the 3 stride-2 3x3 convs (first block of layers 2-4) still go
    # through XLA im2col; a strided tap-accumulation kernel would remove their
    # 9x patch HBM amplification.
    return conv_im2col(x, p, stride=stride, relu=relu)


# --------------------------- parameter construction -------------------------

class _KeyGen:
    def __init__(self, seed):
        self.key = jax.random.PRNGKey(seed)

    def __call__(self):
        self.key, sub = jax.random.split(self.key)
        return sub


def _conv_params(kg, kh, kw, cin, cout, pad, cin_p, cout_p, k_pad=False):
    """Synthetic conv + folded-BN params, lane-padded to (cin_p, cout_p)."""
    fan_in = kh * kw * cin
    w = jax.random.normal(kg(), (kh, kw, cin, cout), jnp.float32) / np.sqrt(fan_in)
    scale = 0.5 + jax.random.uniform(kg(), (cout,), jnp.float32)    # folded BN
    bias = 0.05 * jax.random.normal(kg(), (cout,), jnp.float32)
    w = w * scale                              # pre-fold BN scale into weights
    w_p = jnp.zeros((kh, kw, cin_p, cout_p), jnp.float32)
    w_p = w_p.at[:, :, :cin, :cout].set(w)     # padded channels stay exactly 0
    b_p = jnp.zeros((1, cout_p), jnp.float32).at[:, :cout].set(bias[None, :])
    k_rows = kh * kw * cin_p
    w_flat = w_p.reshape(k_rows, cout_p)
    if k_pad:
        k_rows_p = _rup(k_rows)
        if k_rows_p != k_rows:
            w_flat = jnp.pad(w_flat, ((0, k_rows_p - k_rows), (0, 0)))
    return {"w": w_flat.astype(jnp.bfloat16), "bias": b_p,
            "kh": kh, "kw": kw, "pad": pad}


def _bottleneck_params(kg, cin, cin_p, planes, stride, expansion=4):
    planes_p = _rup(planes)
    cout = planes * expansion
    cout_p = _rup(cout)
    p = {"conv1": _conv_params(kg, 1, 1, cin, planes, 0, cin_p, planes_p),
         "conv2": _conv_params(kg, 3, 3, planes, planes, 1, planes_p, planes_p),
         "conv3": _conv_params(kg, 1, 1, planes, cout, 0, planes_p, cout_p),
         "stride": stride}
    if stride != 1 or cin != cout:
        p["downsample"] = _conv_params(kg, 1, 1, cin, cout, 0, cin_p, cout_p)
    return p, cout, cout_p


def make_rescnn_encoder_params(seed=0, base_width=8, in_channels=3,
                               blocks=(3, 4, 23, 3)):
    kg = _KeyGen(seed)
    params = {"stem": _conv_params(kg, 7, 7, in_channels, base_width, 3,
                                   in_channels, _rup(base_width), k_pad=True),
              "layers": []}
    cin, cin_p = base_width, _rup(base_width)
    for li, nb in enumerate(blocks):
        planes = base_width * (2 ** li)
        first_stride = 1 if li == 0 else 2
        layer = []
        for bi in range(nb):
            bp, cin, cin_p = _bottleneck_params(
                kg, cin, cin_p, planes, first_stride if bi == 0 else 1)
            layer.append(bp)
        params["layers"].append(layer)
    params["feat_dim"] = cin            # real (unpadded) feature width
    params["feat_dim_pad"] = cin_p
    return params


# --------------------------------- forward ----------------------------------

def _bottleneck_forward(x, p):
    out = conv1x1(x, p["conv1"], stride=1, relu=True)
    out = conv3x3(out, p["conv2"], stride=p["stride"], relu=True)
    if "downsample" in p:
        identity = conv1x1(x, p["downsample"], stride=p["stride"], relu=False)
    else:
        identity = x
    # conv3 (1x1) with the residual add + final ReLU fused into its epilogue.
    return conv1x1(out, p["conv3"], stride=1, relu=True, residual=identity)


def rescnn_encoder_forward(x_nchw, params):
    """x_nchw: (N, C, H, W) float32 -> fc_feats: (N, feat_dim) float32."""
    x = jnp.transpose(x_nchw, (0, 2, 3, 1)).astype(jnp.bfloat16)   # NCHW -> NHWC
    x = conv_im2col(x, params["stem"], stride=2, relu=True)        # 7x7/2 stem
    x = max_pool_3x3_s2(x)                                         # maxpool 3x3/2
    for layer in params["layers"]:
        for bp in layer:
            x = _bottleneck_forward(x, bp)
    n, h, w, c = x.shape
    feats = spatial_mean(x.reshape(n, h * w, c))    # fc_feats = x.mean(3).mean(2)
    return feats[:, :params["feat_dim"]]            # drop lane-padding channels


# ----------------------------------- main ------------------------------------

if __name__ == "__main__":
    key = jax.random.PRNGKey(0)
    x = jax.random.uniform(key, (2, 3, 16, 16), dtype=jnp.float32)  # NCHW input
    params = make_rescnn_encoder_params(seed=0, base_width=8, in_channels=3)

    fc_feats = rescnn_encoder_forward(x, params)
    fc_feats = jax.block_until_ready(fc_feats)

    assert fc_feats.shape == (2, params["feat_dim"]), fc_feats.shape
    assert bool(jnp.all(jnp.isfinite(fc_feats)))
    print("KERNEL_OK")
</pallas_src>

<mosaic_0001>
module attributes {stable_mosaic.version = 11 : i64} {
  func.func @_gemm_kernel(%arg0: i32, %arg1: memref<64x256xbf16, #tpu.memory_space<vmem>>, %arg2: memref<256x128xbf16, #tpu.memory_space<vmem>>, %arg3: memref<1x128xf32, #tpu.memory_space<vmem>>, %arg4: memref<64x128xbf16, #tpu.memory_space<vmem>>) attributes {dimension_semantics = [#tpu.dimension_semantics<parallel>], iteration_bounds = array<i64: 2>, scalar_prefetch = 0 : i64, scratch_operands = 0 : i64, tpu.core_type = #tpu.core_type<tc>, window_params = [{transform_indices = @transform_0, window_bounds = array<i64: 64, 256>}, {pipeline_mode = #tpu.pipeline_mode<synchronous>, transform_indices = @transform_1, window_bounds = array<i64: 256, 128>}, {pipeline_mode = #tpu.pipeline_mode<synchronous>, transform_indices = @transform_2, window_bounds = array<i64: 1, 128>}, {transform_indices = @transform_3, window_bounds = array<i64: 64, 128>}]} {
    %c0 = arith.constant 0 : index
    %c0_0 = arith.constant 0 : index
    %0 = vector.load %arg1[%c0, %c0_0] : memref<64x256xbf16, #tpu.memory_space<vmem>>, vector<64x256xbf16>
    %c0_1 = arith.constant 0 : index
    %c0_2 = arith.constant 0 : index
    %1 = vector.load %arg2[%c0_1, %c0_2] : memref<256x128xbf16, #tpu.memory_space<vmem>>, vector<256x128xbf16>
    %cst = arith.constant dense<0.000000e+00> : vector<64x128xf32>
    %2 = tpu.matmul %0, %1, %cst {dimension_numbers = #tpu.dot_dimension_numbers<[1], [0], [0], [1], [0, 0, 1, 1], [], []>} : vector<64x256xbf16>, vector<256x128xbf16>, vector<64x128xf32> -> vector<64x128xf32>
    %c0_3 = arith.constant 0 : index
    %c0_4 = arith.constant 0 : index
    %3 = vector.load %arg3[%c0_3, %c0_4] : memref<1x128xf32, #tpu.memory_space<vmem>>, vector<1x128xf32>
    %4 = vector.broadcast %3 : vector<1x128xf32> to vector<64x128xf32>
    %5 = arith.addf %2, %4 : vector<64x128xf32>
    %cst_5 = arith.constant 0.000000e+00 : f32
    %6 = vector.broadcast %cst_5 : f32 to vector<64x128xf32>
    %7 = arith.maximumf %5, %6 : vector<64x128xf32>
    %8 = arith.truncf %7 : vector<64x128xf32> to vector<64x128xbf16>
    %c0_6 = arith.constant 0 : index
    %c0_7 = arith.constant 0 : index
    %9 = vector.load %arg4[%c0_6, %c0_7] : memref<64x128xbf16, #tpu.memory_space<vmem>>, vector<64x128xbf16>
    tpu.vector_store %arg4[%c0_6, %c0_7], %8 {strides = array<i32>} : memref<64x128xbf16, #tpu.memory_space<vmem>>, vector<64x128xbf16>,
    return
  }
  func.func @transform_0(%arg0: i32) -> (i32, i32) {
    %c0_i32 = arith.constant 0 : i32
    %c0_i32_0 = arith.constant 0 : i32
    return %arg0, %c0_i32 : i32, i32
  }
  func.func @transform_1(%arg0: i32) -> (i32, i32) {
    %c0_i32 = arith.constant 0 : i32
    %c0_i32_0 = arith.constant 0 : i32
    %c0_i32_1 = arith.constant 0 : i32
    return %c0_i32, %c0_i32_0 : i32, i32
  }
  func.func @transform_2(%arg0: i32) -> (i32, i32) {
    %c0_i32 = arith.constant 0 : i32
    %c0_i32_0 = arith.constant 0 : i32
    %c0_i32_1 = arith.constant 0 : i32
    return %c0_i32, %c0_i32_0 : i32, i32
  }
  func.func @transform_3(%arg0: i32) -> (i32, i32) {
    %c0_i32 = arith.constant 0 : i32
    %c0_i32_0 = arith.constant 0 : i32
    return %arg0, %c0_i32 : i32, i32
  }
}

</mosaic_0001>

<llo_original>
// kernel: gemm_bias_act.1
$region0: #{gemm_bias_act.1}
  #allocation0 [shape = 'u32[]', space=smem, size = 0x4, offset = 0x4, fixed_abs, tag = 'smem constant byte address 0x4 - core index']
  #allocation1 [shape = 'u32[144,128]{1,0:T(1,128)}', space=vmem, size = 0x12000, scoped, tag = 'internal scratch']
  %s0 = inlined_call_operand.hbm [shape: bf16[128,256], index: 0, kind: input, shape index: {}]
  %s1 = inlined_call_operand.hbm [shape: bf16[256,128], index: 1, kind: input, shape index: {}]
  %s2 = inlined_call_operand.vmem [shape: f32[1,128], index: 2, kind: input, shape index: {}]
  %s3 = inlined_call_operand.hbm [shape: bf16[128,128], index: 3, kind: output, shape index: {}]
  %s4 = sld [smem:[#allocation0]]
  $region53: #{gemm_bias_act.1} parent=0
    _
  %s6 = ssub.s32 1, %s4
  %s7 = scalar_select 0, %s6, %s4
  $region1: #{gemm_bias_act.1} parent=0
    #allocation2 [shape = 'u8[65536]{0}', space=vmem, size = 0x10000, scoped, tag = 'input window, operand 0']
    #allocation3 [shape = 's32[2]{0}', space=sflag, size = 0x8, scoped, tag = 'scoped memory for gemm_bias_act.1']
    #allocation4 [shape = 's32[2]{0}', space=sflag, size = 0x8, scoped, tag = 'scoped memory for gemm_bias_act.1']
    #allocation5 [shape = 'u8[65536]{0}', space=vmem, size = 0x10000, scoped, tag = 'input window, operand 1, single buffered']
    #allocation6 [shape = 's32[1]{0}', space=sflag, size = 0x4, scoped, tag = 'scoped memory for gemm_bias_act.1']
    #allocation7 [shape = 'u8[32768]{0}', space=vmem, size = 0x8000, scoped, tag = 'output window, operand 0']
    %8 = vsyncpa [#allocation3], 0
    %s9 = scalar_lea.sflag [#allocation3], 1
    %10 = vsyncpa %s9, 0
    %11 = vsyncpa [#allocation6], 0
    %12 = vsyncpa [#allocation4], 0
    %s13 = scalar_lea.sflag [#allocation4], 1
    %14 = vsyncpa %s13, 0
    loop: start=0, step=1, limit=4
    $region2: #{gemm_bias_act.1} parent=1 // loop_pre_header
      _
    $region3: #{gemm_bias_act.1} parent=1 // loop_header
      %s16 = sphi 0, %s20
      %p17 = scmp.ge.s32.totalorder %s16, 4
      %s26 = sphi 0, %s28
      %s29 = sphi 0, %s26
      %s30 = sphi 0, %s29
      %s46 = sphi 0, %s30
      %s50 = sphi 0, %s50
      %s52 = sphi 0, %s50
      %s53 = sphi 0, %s52
      %s67 = sphi 0, %s53
      %s71 = sphi 0, %s71
      %s73 = sphi 0, %s71
      %s74 = sphi 0, %s73
      %s88 = sphi 0, %s74
      %s94 = sphi 0, %s96
      %s97 = sphi 0, %s94
      %s98 = sphi 0, %s97
      %s114 = sphi 0, %s98
    $region4: #{gemm_bias_act.1} parent=1 // loop_header_branch
      %19 = sbr.rel (%p17) target = $region8
    $region5: #{gemm_bias_act.1} parent=1 // loop_body
      %s21 = ssub.s32 %s16, 1
      %s22 = ssub.s32 %s16, 2
      %s23 = sadd.s32 %s16, 1
      %s24 = ssub.s32 %s16, %s23
      %p25 = scmp.eq.s32.totalorder %s24, 0
      %s27 = sadd.s32 %s26, 1
      %s28 = scalar_select %p25, %s26, %s27
      %p31 = pneg %p25
      %p32 = scmp.eq.s32.totalorder %s16, 1
      %p33 = por %p31, %p32
      %p34 = scmp.ne.s32.totalorder %s26, %s29
      %p35 = scmp.eq.s32.totalorder %s16, 0
      %p36 = por %p34, %p35
      %p37 = scmp.ne.s32.totalorder %s26, %s29
      %p38 = scmp.eq.s32.totalorder %s21, 1
      %p39 = por %p37, %p38
      %p40 = scmp.ne.s32.totalorder %s29, %s30
      %p41 = scmp.eq.s32.totalorder %s21, 0
      %p42 = por %p40, %p41
      %p43 = scmp.ne.s32.totalorder %s29, %s30
      %p44 = scmp.eq.s32.totalorder %s22, 1
      %p45 = por %p43, %p44
      %p47 = scmp.ne.s32.totalorder %s30, %s46
      %p48 = scmp.eq.s32.totalorder %s22, 0
      %p49 = por %p47, %p48
      %s51 = sadd.s32 %s50, 1
      %p54 = scmp.eq.s32.totalorder %s16, 1
      %p55 = scmp.ne.s32.totalorder %s50, %s52
      %p56 = scmp.eq.s32.totalorder %s16, 0
      %p57 = por %p55, %p56
      %p58 = scmp.ne.s32.totalorder %s50, %s52
      %p59 = scmp.eq.s32.totalorder %s21, 1
      %p60 = por %p58, %p59
      %p61 = scmp.ne.s32.totalorder %s52, %s53
      %p62 = scmp.eq.s32.totalorder %s21, 0
      %p63 = por %p61, %p62
      %p64 = scmp.ne.s32.totalorder %s52, %s53
      %p65 = scmp.eq.s32.totalorder %s22, 1
      %p66 = por %p64, %p65
      %p68 = scmp.ne.s32.totalorder %s53, %s67
      %p69 = scmp.eq.s32.totalorder %s22, 0
      %p70 = por %p68, %p69
      %s72 = sadd.s32 %s71, 1
      %p75 = scmp.eq.s32.totalorder %s16, 1
      %p76 = scmp.ne.s32.totalorder %s71, %s73
      %p77 = scmp.eq.s32.totalorder %s16, 0
      %p78 = por %p76, %p77
      %p79 = scmp.ne.s32.totalorder %s71, %s73
      %p80 = scmp.eq.s32.totalorder %s21, 1
      %p81 = por %p79, %p80
      %p82 = scmp.ne.s32.totalorder %s73, %s74
      %p83 = scmp.eq.s32.totalorder %s21, 0
      %p84 = por %p82, %p83
      %p85 = scmp.ne.s32.totalorder %s73, %s74
      %p86 = scmp.eq.s32.totalorder %s22, 1
      %p87 = por %p85, %p86
      %p89 = scmp.ne.s32.totalorder %s74, %s88
      %p90 = scmp.eq.s32.totalorder %s22, 0
      %p91 = por %p89, %p90
      %s92 = ssub.s32 %s16, %s23
      %p93 = scmp.eq.s32.totalorder %s92, 0
      %s95 = sadd.s32 %s94, 1
      %s96 = scalar_select %p93, %s94, %s95
      %p99 = pneg %p93
      %p100 = scmp.eq.s32.totalorder %s16, 1
      %p101 = por %p99, %p100
      %p102 = scmp.ne.s32.totalorder %s94, %s97
      %p103 = scmp.eq.s32.totalorder %s16, 0
      %p104 = por %p102, %p103
      %p105 = scmp.ne.s32.totalorder %s94, %s97
      %p106 = scmp.eq.s32.totalorder %s21, 1
      %p107 = por %p105, %p106
      %p108 = scmp.ne.s32.totalorder %s97, %s98
      %p109 = scmp.eq.s32.totalorder %s21, 0
      %p110 = por %p108, %p109
      %p111 = scmp.ne.s32.totalorder %s97, %s98
      %p112 = scmp.eq.s32.totalorder %s22, 1
      %p113 = por %p111, %p112
      %p115 = scmp.ne.s32.totalorder %s98, %s114
      %p116 = scmp.eq.s32.totalorder %s22, 0
      %p117 = por %p115, %p116
      %p118 = scmp.le.s32.totalorder 1, %s16
      %p119 = scmp.lt.s32.totalorder %s16, 3
      %p120 = pnand %p118, %p119
      %p121 = pneg %p120
      // Predicated region
      $region9: #{gemm_bias_act.1} parent=5 // pred_check
        _
      $region10: #{gemm_bias_act.1} parent=5 // pred_check_branch
        %123 = sbr.rel (%p120) target = $region12
      $region11: #{gemm_bias_act.1} parent=5 // pred_region
        %s124 = ssub.s32 %s16, 1
        // Predicated region
        $region13: #{gemm_bias_act.1} parent=11 // pred_check
          %p125 = pneg %p63
        $region14: #{gemm_bias_act.1} parent=11 // pred_check_branch
          %127 = sbr.rel (%p125) target = $region16
        $region15: #{gemm_bias_act.1} parent=11 // pred_region
          %s129 = ssub.s32 2048, 2048
          %130 = vsyncadd [#allocation6], %s129
          %s131 = sshll.u32 [#allocation5], 4
          %s132 = int_to_ptr.vmem [resolvable:$true] %s131
          %137 = dma.hbm_to_vmem [thread:$0]  %s1, 2048, %s132, [#allocation6], 64, 64, 4
        $region16: #{gemm_bias_act.1} parent=11 // pred_fallthru
          _
        // Predicated region
        $region17: #{gemm_bias_act.1} parent=11 // pred_check
          %p138 = pneg %p84
        $region18: #{gemm_bias_act.1} parent=11 // pred_check_branch
          %140 = sbr.rel (%p138) target = $region20
        $region19: #{gemm_bias_act.1} parent=11 // pred_region
          _
        $region20: #{gemm_bias_act.1} parent=11 // pred_fallthru
          _
      $region12: #{gemm_bias_act.1} parent=5 // pred_fallthru
        _
      %p141 = scmp.lt.s32.totalorder %s16, 2
      // Predicated region
      $region21: #{gemm_bias_act.1} parent=5 // pred_check
        %p142 = pneg %p141
      $region22: #{gemm_bias_act.1} parent=5 // pred_check_branch
        %144 = sbr.rel (%p142) target = $region24
      $region23: #{gemm_bias_act.1} parent=5 // pred_region
        // Predicated region
        $region25: #{gemm_bias_act.1} parent=23 // pred_check
          %p145 = pneg %p36
        $region26: #{gemm_bias_act.1} parent=23 // pred_check_branch
          %147 = sbr.rel (%p145) target = $region28
        $region27: #{gemm_bias_act.1} parent=23 // pred_region
          %s148 = sand.u32 %s26, 1
          %s149 = scalar_lea.sflag [#allocation3], %s148
          %s150 = sand.u32 %s26, 1
          %s151 = smul.addr %s150, 64
          %s152 = scalar_lea.vmem [#allocation2], %s151
          %s153 = smul.u32 8, %s16
          %s155 = ssub.s32 1024, 1024
          %156 = vsyncadd %s149, %s155
          %s157 = smul.addr %s153, 2
          %s158 = smul.addr %s157, 64
          %s159 = scalar_lea.hbm %s0, %s158
          %s160 = sshll.u32 %s152, 4
          %s161 = int_to_ptr.vmem [resolvable:$true] %s160
          %166 = dma.hbm_to_vmem [thread:$0]  %s159, 1024, %s161, %s149, 128, 128, 8
        $region28: #{gemm_bias_act.1} parent=23 // pred_fallthru
          _
      $region24: #{gemm_bias_act.1} parent=5 // pred_fallthru
        _
      %p167 = scmp.le.s32.totalorder 1, %s16
      %p168 = scmp.lt.s32.totalorder %s16, 3
      %p169 = pnand %p167, %p168
      %p170 = pneg %p169
      // Predicated region
      $region29: #{gemm_bias_act.1} parent=5 // pred_check
        _
      $region30: #{gemm_bias_act.1} parent=5 // pred_check_branch
        %172 = sbr.rel (%p169) target = $region32
      $region31: #{gemm_bias_act.1} parent=5 // pred_region
        %s173 = ssub.s32 %s16, 1
        %s174 = sand.u32 %s29, 1
        %s175 = scalar_lea.sflag [#allocation3], %s174
        %s176 = sand.u32 %s29, 1
        %s177 = smul.addr %s176, 64
        %s178 = scalar_lea.vmem [#allocation2], %s177
        // Predicated region
        $region33: #{gemm_bias_act.1} parent=31 // pred_check
          %p179 = pneg %p42
        $region34: #{gemm_bias_act.1} parent=31 // pred_check_branch
          %181 = sbr.rel (%p179) target = $region36
        $region35: #{gemm_bias_act.1} parent=31 // pred_region
          %182 = dma.done %s175, 1024
        $region36: #{gemm_bias_act.1} parent=31 // pred_fallthru
          _
        // Predicated region
        $region37: #{gemm_bias_act.1} parent=31 // pred_check
          %p183 = pneg %p63
        $region38: #{gemm_bias_act.1} parent=31 // pred_check_branch
          %185 = sbr.rel (%p183) target = $region40
        $region39: #{gemm_bias_act.1} parent=31 // pred_region
          %186 = dma.done [#allocation6], 2048
        $region40: #{gemm_bias_act.1} parent=31 // pred_fallthru
          _
        %s187 = sand.u32 %s29, 1
        %s188 = scalar_lea.sflag [#allocation3], %s187
        %s189 = sand.u32 %s29, 1
        %s190 = smul.addr %s189, 64
        %s191 = scalar_lea.vmem [#allocation2], %s190
        %p192 = pneg %p42
        %p193 = pneg %p39
        %p194 = pneg %p63
        %p195 = pneg %p60
        %p196 = pneg %p84
        %p197 = pneg %p81
        %p198 = pneg %p110
        %p199 = pneg %p107
        %s200 = sand.u32 %s97, 1
        %s201 = scalar_lea.sflag [#allocation4], %s200
        %s202 = sand.u32 %s97, 1
        %s203 = smul.addr %s202, 32
        %s204 = scalar_lea.vmem [#allocation7], %s203
        %s205 = smul.u32 8, %s21
        %s206 = smul.u32 8, %s21
        %v208 = vld [vmem:[%s178] sm:$0xff]
        %v209 = vld [vmem:[%s178 + $0x8] sm:$0xff]
        %v210 = vld [vmem:[%s178 + $0x10] sm:$0xff]
        %v211 = vld [vmem:[%s178 + $0x18] sm:$0xff]
        %v212 = vld [vmem:[%s178 + $0x20] sm:$0xff]
        %v213 = vld [vmem:[%s178 + $0x28] sm:$0xff]
        %v214 = vld [vmem:[%s178 + $0x30] sm:$0xff]
        %v215 = vld [vmem:[%s178 + $0x38] sm:$0xff]
        %v216 = vld [vmem:[#allocation5] sm:$0xf]
        %v217 = vld [vmem:[#allocation5 + $0x4] sm:$0xf]
        %v218 = vld [vmem:[#allocation5 + $0x8] sm:$0xf]
        %v219 = vld [vmem:[#allocation5 + $0xc] sm:$0xf]
        %v220 = vld [vmem:[#allocation5 + $0x10] sm:$0xf]
        %v221 = vld [vmem:[#allocation5 + $0x14] sm:$0xf]
        %v222 = vld [vmem:[#allocation5 + $0x18] sm:$0xf]
        %v223 = vld [vmem:[#allocation5 + $0x1c] sm:$0xf]
        %v224 = vld [vmem:[#allocation5 + $0x20] sm:$0xf]
        %v225 = vld [vmem:[#allocation5 + $0x24] sm:$0xf]
        %v226 = vld [vmem:[#allocation5 + $0x28] sm:$0xf]
        %v227 = vld [vmem:[#allocation5 + $0x2c] sm:$0xf]
        %v228 = vld [vmem:[#allocation5 + $0x30] sm:$0xf]
        %v229 = vld [vmem:[#allocation5 + $0x34] sm:$0xf]
        %v230 = vld [vmem:[#allocation5 + $0x38] sm:$0xf]
        %v231 = vld [vmem:[#allocation5 + $0x3c] sm:$0xf]
        %v232 = vld [vmem:[#allocation5 + $0x40] sm:$0xf]
        %v233 = vld [vmem:[#allocation5 + $0x44] sm:$0xf]
        %v234 = vld [vmem:[#allocation5 + $0x48] sm:$0xf]
        %v235 = vld [vmem:[#allocation5 + $0x4c] sm:$0xf]
        %v236 = vld [vmem:[#allocation5 + $0x50] sm:$0xf]
        %v237 = vld [vmem:[#allocation5 + $0x54] sm:$0xf]
        %v238 = vld [vmem:[#allocation5 + $0x58] sm:$0xf]
        %v239 = vld [vmem:[#allocation5 + $0x5c] sm:$0xf]
        %v240 = vld [vmem:[#allocation5 + $0x60] sm:$0xf]
        %v241 = vld [vmem:[#allocation5 + $0x64] sm:$0xf]
        %v242 = vld [vmem:[#allocation5 + $0x68] sm:$0xf]
        %v243 = vld [vmem:[#allocation5 + $0x6c] sm:$0xf]
        %v244 = vld [vmem:[#allocation5 + $0x70] sm:$0xf]
        %v245 = vld [vmem:[#allocation5 + $0x74] sm:$0xf]
        %v246 = vld [vmem:[#allocation5 + $0x78] sm:$0xf]
        %v247 = vld [vmem:[#allocation5 + $0x7c] sm:$0xf]
        %v248 = vld [vmem:[%s2] sm:$0x1]
        %v250 = vlaneseq
        %v251 = vshrl.u32 %v250, 7
        %v252 = vsub.s32 0, %v251
        %v253 = vrot.slane %v248, %v252
        %v263 = vunpack.c.l.b16 %v208
        %v264 = vunpack.c.h.b16 %v208
        %v265 = vunpack.c.l.b16 %v209
        %v266 = vunpack.c.h.b16 %v209
        %v267 = vunpack.c.l.b16 %v210
        %v268 = vunpack.c.h.b16 %v210
        %v269 = vunpack.c.l.b16 %v211
        %v270 = vunpack.c.h.b16 %v211
        %v271 = vunpack.c.l.b16 %v212
        %v272 = vunpack.c.h.b16 %v212
        %v273 = vunpack.c.l.b16 %v213
        %v274 = vunpack.c.h.b16 %v213
        %v275 = vunpack.c.l.b16 %v214
        %v276 = vunpack.c.h.b16 %v214
        %v277 = vunpack.c.l.b16 %v215
        %v278 = vunpack.c.h.b16 %v215
        %v279 = vpack.c.b16 %v265, %v263
        %v280 = vpack.c.b16 %v266, %v264
        %v281 = vpack.c.b16 %v269, %v267
        %v282 = vpack.c.b16 %v270, %v268
        %v283 = vpack.c.b16 %v273, %v271
        %v284 = vpack.c.b16 %v274, %v272
        %v285 = vpack.c.b16 %v277, %v275
        %v286 = vpack.c.b16 %v278, %v276
        %v327 = vunpack.c.l.b16 %v216
        %v328 = vunpack.c.l.b16 %v217
        %v329 = vunpack.c.l.b16 %v218
        %v330 = vunpack.c.l.b16 %v219
        %v331 = vunpack.c.l.b16 %v220
        %v332 = vunpack.c.l.b16 %v221
        %v333 = vunpack.c.l.b16 %v222
        %v334 = vunpack.c.l.b16 %v223
        %v335 = vunpack.c.l.b16 %v224
        %v336 = vunpack.c.l.b16 %v225
        %v337 = vunpack.c.l.b16 %v226
        %v338 = vunpack.c.l.b16 %v227
        %v339 = vunpack.c.l.b16 %v228
        %v340 = vunpack.c.l.b16 %v229
        %v341 = vunpack.c.l.b16 %v230
        %v342 = vunpack.c.l.b16 %v231
        %v343 = vunpack.c.l.b16 %v232
        %v344 = vunpack.c.l.b16 %v233
        %v345 = vunpack.c.l.b16 %v234
        %v346 = vunpack.c.l.b16 %v235
        %v347 = vunpack.c.l.b16 %v236
        %v348 = vunpack.c.l.b16 %v237
        %v349 = vunpack.c.l.b16 %v238
        %v350 = vunpack.c.l.b16 %v239
        %v351 = vunpack.c.l.b16 %v240
        %v352 = vunpack.c.l.b16 %v241
        %v353 = vunpack.c.l.b16 %v242
        %v354 = vunpack.c.l.b16 %v243
        %v355 = vunpack.c.l.b16 %v244
        %v356 = vunpack.c.l.b16 %v245
        %v357 = vunpack.c.l.b16 %v246
        %v358 = vunpack.c.l.b16 %v247
        %v359 = vpack.c.b16 %v328, %v327
        %v360 = vpack.c.b16 %v330, %v329
        %v361 = vpack.c.b16 %v332, %v331
        %v362 = vpack.c.b16 %v334, %v333
        %v363 = vpack.c.b16 %v336, %v335
        %v364 = vpack.c.b16 %v338, %v337
        %v365 = vpack.c.b16 %v340, %v339
        %v366 = vpack.c.b16 %v342, %v341
        %v367 = vpack.c.b16 %v344, %v343
        %v368 = vpack.c.b16 %v346, %v345
        %v369 = vpack.c.b16 %v348, %v347
        %v370 = vpack.c.b16 %v350, %v349
        %v371 = vpack.c.b16 %v352, %v351
        %v372 = vpack.c.b16 %v354, %v353
        %v373 = vpack.c.b16 %v356, %v355
        %v374 = vpack.c.b16 %v358, %v357
        %391 = vmatprep.subr.bf16.mxu0 0
        %392 = vmatpush1.bf16.msra.mxu0 %v366
        %393 = vmatprep.subr.bf16.mxu0 0
        %394 = vmatpush1.bf16.msra.mxu0 %v365
        %395 = vmatprep.subr.bf16.mxu0 0
        %396 = vmatpush1.bf16.msra.mxu0 %v364
        %397 = vmatprep.subr.bf16.mxu0 0
        %398 = vmatpush1.bf16.msra.mxu0 %v363
        %399 = vmatprep.subr.bf16.mxu0 0
        %400 = vmatpush1.bf16.msra.mxu0 %v362
        %401 = vmatprep.subr.bf16.mxu0 0
        %402 = vmatpush1.bf16.msra.mxu0 %v361
        %403 = vmatprep.subr.bf16.mxu0 0
        %404 = vmatpush1.bf16.msra.mxu0 %v360
        %405 = vmatprep.subr.bf16.mxu0 0
        %406 = vmatpush1.bf16.msra.mxu0 %v359
        %407 = vmatprep.subr.bf16.mxu0 0
        %408 = vmatpush2.bf16.msra.mxu0 %v374
        %409 = vmatprep.subr.bf16.mxu0 0
        %410 = vmatpush2.bf16.msra.mxu0 %v373
        %411 = vmatprep.subr.bf16.mxu0 0
        %412 = vmatpush2.bf16.msra.mxu0 %v372
        %413 = vmatprep.subr.bf16.mxu0 0
        %414 = vmatpush2.bf16.msra.mxu0 %v371
        %415 = vmatprep.subr.bf16.mxu0 0
        %416 = vmatpush2.bf16.msra.mxu0 %v370
        %417 = vmatprep.subr.bf16.mxu0 0
        %418 = vmatpush2.bf16.msra.mxu0 %v369
        %419 = vmatprep.subr.bf16.mxu0 0
        %420 = vmatpush2.bf16.msra.mxu0 %v368
        %421 = vmatprep.subr.bf16.mxu0 0
        %422 = vmatpush2.bf16.msra.mxu0 %v367
        %423 = vmatprep.mubr.bf16.mxu0 %v280
        %424 = vmatmul.mubr.bf16.gmra.mxu0 %v279
        %v425 = vpop.f32.mrf.mxu0
        %v426 = vadd.f32 %v253, %v425
        %v427 = vpop.f32.mrf.mxu0
        %v428 = vpop.f32.mrf.mxu0
        %v429 = vadd.f32 %v253, %v428
        %v430 = vpop.f32.mrf.mxu0
        %431 = vmatprep.mubr.bf16.mxu0 %v282
        %432 = vmatmul.mubr.bf16.gmra.mxu0 %v281
        %v433 = vpop.f32.mrf.mxu0
        %v434 = vadd.f32 %v253, %v433
        %v435 = vpop.f32.mrf.mxu0
        %v436 = vpop.f32.mrf.mxu0
        %v437 = vadd.f32 %v253, %v436
        %v438 = vpop.f32.mrf.mxu0
        %439 = vmatprep.mubr.bf16.mxu0 %v284
        %440 = vmatmul.mubr.bf16.gmra.mxu0 %v283
        %v441 = vpop.f32.mrf.mxu0
        %v442 = vadd.f32 %v253, %v441
        %v443 = vpop.f32.mrf.mxu0
        %v444 = vpop.f32.mrf.mxu0
        %v445 = vadd.f32 %v253, %v444
        %v446 = vpop.f32.mrf.mxu0
        %447 = vmatprep.mubr.bf16.mxu0 %v286
        %448 = vmatmul.mubr.bf16.gmra.mxu0 %v285
        %v449 = vpop.f32.mrf.mxu0
        %v450 = vadd.f32 %v253, %v449
        %v451 = vpop.f32.mrf.mxu0
        %v452 = vpop.f32.mrf.mxu0
        %v453 = vadd.f32 %v253, %v452
        %v454 = vpop.f32.mrf.mxu0
        %455 = vdwg.mxu0
        %v456 = vmax.f32 %v426, 0.0
        %v457 = vmax.f32 %v429, 0.0
        %v458 = vmax.f32 %v434, 0.0
        %v459 = vmax.f32 %v437, 0.0
        %v460 = vmax.f32 %v442, 0.0
        %v461 = vmax.f32 %v445, 0.0
        %v462 = vmax.f32 %v450, 0.0
        %v463 = vmax.f32 %v453, 0.0
        %v464 = vpack.c.bf16 %v457, %v456
        %v465 = vpack.c.bf16 %v459, %v458
        %v466 = vpack.c.bf16 %v461, %v460
        %v467 = vpack.c.bf16 %v463, %v462
        %v472 = vunpack.c.l.b16 %v464
        %v473 = vunpack.c.h.b16 %v464
        %v474 = vunpack.c.l.b16 %v465
        %v475 = vunpack.c.h.b16 %v465
        %v476 = vunpack.c.l.b16 %v466
        %v477 = vunpack.c.h.b16 %v466
        %v478 = vunpack.c.l.b16 %v467
        %v479 = vunpack.c.h.b16 %v467
        %v480 = vpack.c.b16 %v472, %v472
        %v481 = vpack.c.b16 %v473, %v473
        %v482 = vpack.c.b16 %v474, %v474
        %v483 = vpack.c.b16 %v475, %v475
        %v484 = vpack.c.b16 %v476, %v476
        %v485 = vpack.c.b16 %v477, %v477
        %v486 = vpack.c.b16 %v478, %v478
        %v487 = vpack.c.b16 %v479, %v479
        %496 = vst [vmem:[%s204] sm:$0xf] %v480
        %497 = vst [vmem:[%s204 + $0x4] sm:$0xf] %v481
        %498 = vst [vmem:[%s204 + $0x8] sm:$0xf] %v482
        %499 = vst [vmem:[%s204 + $0xc] sm:$0xf] %v483
        %500 = vst [vmem:[%s204 + $0x10] sm:$0xf] %v484
        %501 = vst [vmem:[%s204 + $0x14] sm:$0xf] %v485
        %502 = vst [vmem:[%s204 + $0x18] sm:$0xf] %v486
        %503 = vst [vmem:[%s204 + $0x1c] sm:$0xf] %v487
        %s504 = sand.u32 %s97, 1
        %s505 = scalar_lea.sflag [#allocation4], %s504
        %s506 = sand.u32 %s97, 1
        %s507 = smul.addr %s506, 32
        %s508 = scalar_lea.vmem [#allocation7], %s507
        // Predicated region
        $region41: #{gemm_bias_act.1} parent=31 // pred_check
          %p509 = pneg %p107
        $region42: #{gemm_bias_act.1} parent=31 // pred_check_branch
          %511 = sbr.rel (%p509) target = $region44
        $region43: #{gemm_bias_act.1} parent=31 // pred_region
          %s512 = smul.u32 8, %s21
          %s514 = ssub.s32 512, 512
          %515 = vsyncadd %s505, %s514
          %s516 = smul.addr %s512, 64
          %s517 = scalar_lea.hbm %s3, %s516
          %s518 = sshll.u32 %s508, 4
          %s519 = int_to_ptr.vmem [resolvable:$true] %s518
          %524 = dma.vmem_to_hbm [thread:$0]  %s519, 512, %s517, %s505, 64, 64, 4
        $region44: #{gemm_bias_act.1} parent=31 // pred_fallthru
          _
      $region32: #{gemm_bias_act.1} parent=5 // pred_fallthru
        _
      %p525 = scmp.le.s32.totalorder 2, %s16
      // Predicated region
      $region45: #{gemm_bias_act.1} parent=5 // pred_check
        %p526 = pneg %p525
      $region46: #{gemm_bias_act.1} parent=5 // pred_check_branch
        %528 = sbr.rel (%p526) target = $region48
      $region47: #{gemm_bias_act.1} parent=5 // pred_region
        %s529 = ssub.s32 %s16, 2
        // Predicated region
        $region49: #{gemm_bias_act.1} parent=47 // pred_check
          %p530 = pneg %p113
        $region50: #{gemm_bias_act.1} parent=47 // pred_check_branch
          %532 = sbr.rel (%p530) target = $region52
        $region51: #{gemm_bias_act.1} parent=47 // pred_region
          %s533 = sand.u32 %s98, 1
          %s534 = scalar_lea.sflag [#allocation4], %s533
          %s535 = sand.u32 %s98, 1
          %s536 = smul.addr %s535, 32
          %s537 = scalar_lea.vmem [#allocation7], %s536
          %538 = dma.done %s534, 512
        $region52: #{gemm_bias_act.1} parent=47 // pred_fallthru
          _
      $region48: #{gemm_bias_act.1} parent=5 // pred_fallthru
        _
    $region6: #{gemm_bias_act.1} parent=1 // loop_footer
      %s20 = sadd.s32 1, %s16
    $region7: #{gemm_bias_act.1} parent=1 // loop_footer_branch
      %15 = sbr.rel target = $region3
    $region8: #{gemm_bias_act.1} parent=1 // loop_exit
      _
    %539 = vsyncpa [#allocation3], 1
    %s540 = scalar_lea.sflag [#allocation3], 1
    %541 = vsyncpa %s540, 1
    %542 = vsyncpa [#allocation6], 1
    %543 = vsyncpa [#allocation4], 1
    %s544 = scalar_lea.sflag [#allocation4], 1
    %545 = vsyncpa %s544, 1

</llo_original>
